<compile_context>
chip_gen: v7x
topology: tpu7x:2x2x1
jax: 0.10.0
libtpu: 0.0.40
codegen_flags: <defaults>
</compile_context>

<pallas_src>
import functools

import jax
import jax.numpy as jnp
from jax import lax
from jax.experimental import pallas as pl
from jax.experimental.pallas import tpu as pltpu

_LANE = 128
_SUBLANE = 8


def _fold_strip(x_blk, m_blk, acc_sum, acc_cnt, row0, *, min_v, max_v, rows,
                needs_edge):
    """Accumulate one row-strip into the (8, 128) VMEM accumulators."""
    sr = x_blk.shape[0]                       # static strip height, mult of 8
    x = x_blk.astype(jnp.float32)
    sel = m_blk if m_blk.dtype == jnp.bool_ else (m_blk != 0)
    if needs_edge:
        # Only emitted when the grid has ragged / duplicated tiles.
        ridx = row0 + lax.broadcasted_iota(jnp.int32, (sr, _LANE), 0)
        sel = jnp.logical_and(sel, ridx < rows)
    dmin = jnp.minimum(x, min_v) - min_v
    dmax = jnp.maximum(x, max_v) - max_v
    # NOTE: keep a select here (garbage rows of a ragged tile may hold
    # NaN/Inf); never switch to multiplying by the mask.
    term = jnp.where(sel, dmin * dmin + dmax * dmax, 0.0)
    cnt = sel.astype(jnp.float32)
    sub = sr // _SUBLANE
    acc_sum[...] += term.reshape(sub, _SUBLANE, _LANE).sum(axis=0)
    acc_cnt[...] += cnt.reshape(sub, _SUBLANE, _LANE).sum(axis=0)


def _hu_loss_kernel(x_ref, m_ref, sum_ref, cnt_ref, acc_sum, acc_cnt, *,
                    min_v, max_v, rows, tile_rows, strip_rows,
                    tiles_per_split, needs_edge):
    c = pl.program_id(0)          # megacore split axis ("parallel")
    t = pl.program_id(1)          # streaming reduction axis ("arbitrary")

    @pl.when(t == 0)
    def _():
        acc_sum[...] = jnp.zeros_like(acc_sum)
        acc_cnt[...] = jnp.zeros_like(acc_cnt)

    tile_row0 = (c * tiles_per_split + t) * tile_rows if needs_edge else 0

    fold = functools.partial(_fold_strip, min_v=min_v, max_v=max_v, rows=rows,
                             needs_edge=needs_edge)

    n_full = tile_rows // strip_rows
    rem = tile_rows - n_full * strip_rows

    if n_full > 0:
        def strip(i, carry):
            r0 = pl.multiple_of(i * strip_rows, strip_rows)
            fold(x_ref[pl.ds(r0, strip_rows), :],
                 m_ref[pl.ds(r0, strip_rows), :],
                 acc_sum, acc_cnt, tile_row0 + r0)
            return carry
        lax.fori_loop(0, n_full, strip, 0)

    if rem > 0:                   # static remainder strip (small slabs only)
        r0 = n_full * strip_rows
        fold(x_ref[pl.ds(r0, rem), :], m_ref[pl.ds(r0, rem), :],
             acc_sum, acc_cnt, tile_row0 + r0)

    @pl.when(t == pl.num_programs(1) - 1)
    def _():
        # Lane-dense (1, 1, 128) partials; the final lane reduce + divide
        # happen in the wrapper (one cheap op).
        sum_ref[...] = jnp.sum(acc_sum[...], axis=0, keepdims=True).reshape(
            1, 1, _LANE)
        cnt_ref[...] = jnp.sum(acc_cnt[...], axis=0, keepdims=True).reshape(
            1, 1, _LANE)


def _device_defaults():
    """(tile_rows, parallel_splits) defaults per TPU generation."""
    try:
        kind = jax.devices()[0].device_kind.lower()
    except Exception:
        return 4096, 1
    if "v7" in kind or "7x" in kind:
        # v7x: ~3.2 TB/s HBM per TC and 2 TCs -> bigger tiles + core split.
        return 8192, 2
    return 4096, 1


def hu_loss(x, mask, config, *, tile_rows=None, parallel_splits=None,
            strip_rows=256):
    """Pallas implementation of HULoss.forward(input, mask).

    `x` may be f32 or bf16 (bf16 is streamed as-is and upcast per tile inside
    the kernel).  `mask` should be bool (passed straight through, 1 B/elem);
    other dtypes are converted with `mask != 0`.
    Note: an all-false mask divides by zero -> inf/nan, matching the PyTorch
    reference (mean over an empty selection).
    """
    bias = float(config['bias'])
    factor = float(config['factor'])
    min_v = (float(config['min']) + bias) / factor
    max_v = (float(config['max']) + bias) / factor

    dflt_tile, dflt_splits = _device_defaults()
    if tile_rows is None:
        tile_rows = dflt_tile
    if parallel_splits is None:
        parallel_splits = dflt_splits

    if mask.dtype != jnp.bool_:
        mask = mask != 0                      # correct truthiness (0.5 -> True)

    xf = x.reshape(-1)                        # contiguous reshapes: free
    mf = mask.reshape(-1)
    total = xf.shape[0]
    if total == 0:
        return jnp.float32(jnp.nan)

    # Kernel handles the (8*128)-aligned body; the <1024-element tail (only
    # for unaligned sizes) is reduced here with a tiny jnp expression.
    body_rows = (total // (_SUBLANE * _LANE)) * _SUBLANE
    body = body_rows * _LANE
    tail = total - body

    if tail:
        xt = xf[body:].astype(jnp.float32)
        mt = mf[body:]
        tmin = jnp.minimum(xt, min_v) - min_v
        tmax = jnp.maximum(xt, max_v) - max_v
        tail_sum = jnp.sum(jnp.where(mt, tmin * tmin + tmax * tmax, 0.0))
        tail_cnt = jnp.sum(mt.astype(jnp.float32))

    if body_rows == 0:                        # tiny input: no kernel launch
        return tail_sum / tail_cnt

    xb = xf[:body] if tail else xf
    mb = mf[:body] if tail else mf
    x2 = xb.reshape(body_rows, _LANE)
    m2 = mb.reshape(body_rows, _LANE)
    rows = body_rows

    # ---- tiling -------------------------------------------------------------
    strip_rows = max(_SUBLANE, (int(strip_rows) // _SUBLANE) * _SUBLANE)
    if rows <= tile_rows:
        tile_rows = rows                                    # full-dim block
    else:
        tile_rows = max(32, (int(tile_rows) // 32) * 32)    # 8-bit sublane rule
    num_tiles = pl.cdiv(rows, tile_rows)

    splits = max(1, min(int(parallel_splits), num_tiles))
    tiles_per_split = pl.cdiv(num_tiles, splits)
    last_tile = num_tiles - 1
    needs_clamp = splits * tiles_per_split != num_tiles
    needs_edge = needs_clamp or (rows % tile_rows != 0)

    def in_map(c, t):
        idx = c * tiles_per_split + t
        if needs_clamp:
            # Never DMA out of bounds; duplicated tiles contribute nothing
            # thanks to the (statically gated) row-validity mask.
            idx = jnp.minimum(idx, last_tile)
        return (idx, 0)

    kernel = functools.partial(
        _hu_loss_kernel,
        min_v=min_v, max_v=max_v,            # plain Python floats (no consts)
        rows=rows, tile_rows=tile_rows, strip_rows=strip_rows,
        tiles_per_split=tiles_per_split, needs_edge=needs_edge)

    cost = pl.CostEstimate(
        flops=10 * body, transcendentals=0,
        bytes_accessed=body * (x2.dtype.itemsize + 1) + splits * _LANE * 8)

    part_shape = jax.ShapeDtypeStruct((splits, 1, _LANE), jnp.float32)
    sums, cnts = pl.pallas_call(
        kernel,
        out_shape=(part_shape, part_shape),
        grid_spec=pltpu.PrefetchScalarGridSpec(
            num_scalar_prefetch=0,
            grid=(splits, tiles_per_split),
            in_specs=[
                pl.BlockSpec((tile_rows, _LANE), in_map),   # x (f32 or bf16)
                pl.BlockSpec((tile_rows, _LANE), in_map),   # mask (bool)
            ],
            out_specs=(
                pl.BlockSpec((1, 1, _LANE), lambda c, t: (c, 0, 0)),
                pl.BlockSpec((1, 1, _LANE), lambda c, t: (c, 0, 0)),
            ),
            scratch_shapes=[
                pltpu.VMEM((_SUBLANE, _LANE), jnp.float32),  # fused term sum
                pltpu.VMEM((_SUBLANE, _LANE), jnp.float32),  # masked count
            ],
        ),
        compiler_params=pltpu.CompilerParams(
            # TODO(synk): on v7x verify in xprof that this 'parallel' axis
            # shards across both TensorCores; if it does not, switch it to
            # pltpu.CORE_PARALLEL and consider offloading the row fold to the
            # idle MXU -- not changed here as it cannot be verified offline.
            dimension_semantics=("parallel", "arbitrary")),
        cost_estimate=cost,
    )(x2, m2)

    loss_sum = jnp.sum(sums)
    loss_cnt = jnp.sum(cnts)
    if tail:
        loss_sum = loss_sum + tail_sum
        loss_cnt = loss_cnt + tail_cnt
    return loss_sum / loss_cnt


def hu_loss_ref(x, mask, config):
    """Plain-JAX reference mirroring the PyTorch forward."""
    bias = config['bias']
    factor = config['factor']
    min_v = (config['min'] + bias) / factor
    max_v = (config['max'] + bias) / factor
    xm = x.reshape(-1).astype(jnp.float32)
    m = mask.reshape(-1) != 0
    n = jnp.sum(m.astype(jnp.float32))
    dmin = jnp.minimum(xm, min_v) - min_v
    dmax = jnp.maximum(xm, max_v) - max_v
    loss_min = jnp.sum(jnp.where(m, dmin * dmin, 0.0)) / n
    loss_max = jnp.sum(jnp.where(m, dmax * dmax, 0.0)) / n
    return loss_min + loss_max


if __name__ == "__main__":
    config = {'bias': 1024.0, 'factor': 1000.0, 'min': -1000.0, 'max': 2000.0}
    key = jax.random.PRNGKey(0)
    k1, k2, k3, k4 = jax.random.split(key, 4)

    # Case 1: NCHW activations (1024-aligned size -> zero wrapper-side copies).
    x = jax.random.uniform(k1, (2, 4, 16, 16), jnp.float32, minval=-2.0, maxval=5.0)
    mask = jax.random.bernoulli(k2, 0.6, (2, 4, 16, 16))
    out = jax.block_until_ready(hu_loss(x, mask, config))
    ref = hu_loss_ref(x, mask, config)
    assert jnp.allclose(out, ref, rtol=1e-5, atol=1e-6), (out, ref)

    # Case 2: odd element count -> kernel body + wrapper tail path.
    x2 = jax.random.uniform(k3, (3, 5, 7, 11), jnp.float32, minval=-2.0, maxval=5.0)
    mask2 = jax.random.bernoulli(k4, 0.5, (3, 5, 7, 11))
    out2 = jax.block_until_ready(hu_loss(x2, mask2, config))
    ref2 = hu_loss_ref(x2, mask2, config)
    assert jnp.allclose(out2, ref2, rtol=1e-5, atol=1e-6), (out2, ref2)

    print("KERNEL_OK")
</pallas_src>

<mosaic_0001>
module attributes {stable_mosaic.version = 11 : i64} {
  func.func @_hu_loss_kernel(%arg0: i32, %arg1: i32, %arg2: memref<16x128xf32, #tpu.memory_space<vmem>>, %arg3: memref<16x128xi32, #tpu.memory_space<vmem>>, %arg4: memref<1x1x128xf32, #tpu.memory_space<vmem>>, %arg5: memref<1x1x128xf32, #tpu.memory_space<vmem>>, %arg6: memref<8x128xf32, #tpu.memory_space<vmem>>, %arg7: memref<8x128xf32, #tpu.memory_space<vmem>>) attributes {dimension_semantics = [#tpu.dimension_semantics<parallel>, #tpu.dimension_semantics<arbitrary>], iteration_bounds = array<i64: 1, 1>, scalar_prefetch = 0 : i64, scratch_operands = 2 : i64, tpu.core_type = #tpu.core_type<tc>, window_params = [{transform_indices = @transform_0, window_bounds = array<i64: 16, 128>}, {transform_indices = @transform_1, window_bounds = array<i64: 16, 128>}, {transform_indices = @transform_2, window_bounds = array<i64: 1, 1, 128>}, {transform_indices = @transform_3, window_bounds = array<i64: 1, 1, 128>}]} {
    %c0_i32 = arith.constant 0 : i32
    %0 = arith.cmpi eq, %arg1, %c0_i32 : i32
    %1 = arith.extui %0 : i1 to i32
    %c0_i32_0 = arith.constant 0 : i32
    %2 = arith.cmpi ne, %1, %c0_i32_0 : i32
    scf.if %2 {
      %cst_21 = arith.constant 0.000000e+00 : f32
      %34 = vector.broadcast %cst_21 : f32 to vector<8x128xf32>
      %c0_22 = arith.constant 0 : index
      %c0_23 = arith.constant 0 : index
      %35 = vector.load %arg6[%c0_22, %c0_23] : memref<8x128xf32, #tpu.memory_space<vmem>>, vector<8x128xf32>
      tpu.vector_store %arg6[%c0_22, %c0_23], %34 {strides = array<i32>} : memref<8x128xf32, #tpu.memory_space<vmem>>, vector<8x128xf32>,
      %cst_24 = arith.constant 0.000000e+00 : f32
      %36 = vector.broadcast %cst_24 : f32 to vector<8x128xf32>
      %c0_25 = arith.constant 0 : index
      %c0_26 = arith.constant 0 : index
      %37 = vector.load %arg7[%c0_25, %c0_26] : memref<8x128xf32, #tpu.memory_space<vmem>>, vector<8x128xf32>
      tpu.vector_store %arg7[%c0_25, %c0_26], %36 {strides = array<i32>} : memref<8x128xf32, #tpu.memory_space<vmem>>, vector<8x128xf32>,
    } else {
    }
    %c0 = arith.constant 0 : index
    %c0_1 = arith.constant 0 : index
    %3 = vector.load %arg2[%c0, %c0_1] : memref<16x128xf32, #tpu.memory_space<vmem>>, vector<16x128xf32>
    %c0_2 = arith.constant 0 : index
    %c0_3 = arith.constant 0 : index
    %4 = vector.load %arg3[%c0_2, %c0_3] : memref<16x128xi32, #tpu.memory_space<vmem>>, vector<16x128xi32>
    %cst = arith.constant dense<0> : vector<16x128xi32>
    %5 = arith.cmpi ne, %4, %cst : vector<16x128xi32>
    %cst_4 = arith.constant 2.400000e-02 : f32
    %6 = vector.broadcast %cst_4 : f32 to vector<16x128xf32>
    %7 = arith.minimumf %3, %6 : vector<16x128xf32>
    %cst_5 = arith.constant 2.400000e-02 : f32
    %8 = vector.broadcast %cst_5 : f32 to vector<16x128xf32>
    %9 = arith.subf %7, %8 : vector<16x128xf32>
    %cst_6 = arith.constant 3.024000e+00 : f32
    %10 = vector.broadcast %cst_6 : f32 to vector<16x128xf32>
    %11 = arith.maximumf %3, %10 : vector<16x128xf32>
    %cst_7 = arith.constant 3.024000e+00 : f32
    %12 = vector.broadcast %cst_7 : f32 to vector<16x128xf32>
    %13 = arith.subf %11, %12 : vector<16x128xf32>
    %14 = arith.mulf %9, %9 : vector<16x128xf32>
    %15 = arith.mulf %13, %13 : vector<16x128xf32>
    %16 = arith.addf %14, %15 : vector<16x128xf32>
    %cst_8 = arith.constant 0.000000e+00 : f32
    %17 = vector.broadcast %cst_8 : f32 to vector<16x128xf32>
    %18 = arith.select %5, %16, %17 : vector<16x128xi1>, vector<16x128xf32>
    %19 = arith.extui %5 : vector<16x128xi1> to vector<16x128xi32>
    %20 = arith.sitofp %19 : vector<16x128xi32> to vector<16x128xf32>
    %c0_9 = arith.constant 0 : index
    %c0_10 = arith.constant 0 : index
    %21 = vector.load %arg6[%c0_9, %c0_10] : memref<8x128xf32, #tpu.memory_space<vmem>>, vector<8x128xf32>
    %22 = vector.shape_cast %18 : vector<16x128xf32> to vector<2x8x128xf32>
    %cst_11 = arith.constant dense<0.000000e+00> : vector<8x128xf32>
    %23 = vector.multi_reduction <add>, %22, %cst_11 [0] : vector<2x8x128xf32> to vector<8x128xf32>
    %24 = arith.addf %21, %23 : vector<8x128xf32>
    %c0_12 = arith.constant 0 : index
    %c0_13 = arith.constant 0 : index
    %25 = vector.load %arg6[%c0_12, %c0_13] : memref<8x128xf32, #tpu.memory_space<vmem>>, vector<8x128xf32>
    tpu.vector_store %arg6[%c0_12, %c0_13], %24 {strides = array<i32>} : memref<8x128xf32, #tpu.memory_space<vmem>>, vector<8x128xf32>,
    %c0_14 = arith.constant 0 : index
    %c0_15 = arith.constant 0 : index
    %26 = vector.load %arg7[%c0_14, %c0_15] : memref<8x128xf32, #tpu.memory_space<vmem>>, vector<8x128xf32>
    %27 = vector.shape_cast %20 : vector<16x128xf32> to vector<2x8x128xf32>
    %cst_16 = arith.constant dense<0.000000e+00> : vector<8x128xf32>
    %28 = vector.multi_reduction <add>, %27, %cst_16 [0] : vector<2x8x128xf32> to vector<8x128xf32>
    %29 = arith.addf %26, %28 : vector<8x128xf32>
    %c0_17 = arith.constant 0 : index
    %c0_18 = arith.constant 0 : index
    %30 = vector.load %arg7[%c0_17, %c0_18] : memref<8x128xf32, #tpu.memory_space<vmem>>, vector<8x128xf32>
    tpu.vector_store %arg7[%c0_17, %c0_18], %29 {strides = array<i32>} : memref<8x128xf32, #tpu.memory_space<vmem>>, vector<8x128xf32>,
    %c0_i32_19 = arith.constant 0 : i32
    %31 = arith.cmpi eq, %arg1, %c0_i32_19 : i32
    %32 = arith.extui %31 : i1 to i32
    %c0_i32_20 = arith.constant 0 : i32
    %33 = arith.cmpi ne, %32, %c0_i32_20 : i32
    scf.if %33 {
      %c0_21 = arith.constant 0 : index
      %c0_22 = arith.constant 0 : index
      %34 = vector.load %arg6[%c0_21, %c0_22] : memref<8x128xf32, #tpu.memory_space<vmem>>, vector<8x128xf32>
      %cst_23 = arith.constant dense<0.000000e+00> : vector<128xf32>
      %35 = vector.multi_reduction <add>, %34, %cst_23 [0] : vector<8x128xf32> to vector<128xf32>
      %36 = vector.shape_cast %35 : vector<128xf32> to vector<1x128xf32>
      %37 = vector.shape_cast %36 : vector<1x128xf32> to vector<1x1x128xf32>
      %c0_24 = arith.constant 0 : index
      %c0_25 = arith.constant 0 : index
      %c0_26 = arith.constant 0 : index
      %38 = vector.load %arg4[%c0_24, %c0_25, %c0_26] : memref<1x1x128xf32, #tpu.memory_space<vmem>>, vector<1x1x128xf32>
      tpu.vector_store %arg4[%c0_24, %c0_25, %c0_26], %37 {strides = array<i32>} : memref<1x1x128xf32, #tpu.memory_space<vmem>>, vector<1x1x128xf32>,
      %c0_27 = arith.constant 0 : index
      %c0_28 = arith.constant 0 : index
      %39 = vector.load %arg7[%c0_27, %c0_28] : memref<8x128xf32, #tpu.memory_space<vmem>>, vector<8x128xf32>
      %cst_29 = arith.constant dense<0.000000e+00> : vector<128xf32>
      %40 = vector.multi_reduction <add>, %39, %cst_29 [0] : vector<8x128xf32> to vector<128xf32>
      %41 = vector.shape_cast %40 : vector<128xf32> to vector<1x128xf32>
      %42 = vector.shape_cast %41 : vector<1x128xf32> to vector<1x1x128xf32>
      %c0_30 = arith.constant 0 : index
      %c0_31 = arith.constant 0 : index
      %c0_32 = arith.constant 0 : index
      %43 = vector.load %arg5[%c0_30, %c0_31, %c0_32] : memref<1x1x128xf32, #tpu.memory_space<vmem>>, vector<1x1x128xf32>
      tpu.vector_store %arg5[%c0_30, %c0_31, %c0_32], %42 {strides = array<i32>} : memref<1x1x128xf32, #tpu.memory_space<vmem>>, vector<1x1x128xf32>,
    } else {
    }
    return
  }
  func.func @transform_0(%arg0: i32, %arg1: i32) -> (i32, i32) {
    %c1_i32 = arith.constant 1 : i32
    %0 = arith.muli %arg0, %c1_i32 : i32
    %1 = arith.addi %0, %arg1 : i32
    %c0_i32 = arith.constant 0 : i32
    %c0_i32_0 = arith.constant 0 : i32
    return %1, %c0_i32 : i32, i32
  }
  func.func @transform_1(%arg0: i32, %arg1: i32) -> (i32, i32) {
    %c1_i32 = arith.constant 1 : i32
    %0 = arith.muli %arg0, %c1_i32 : i32
    %1 = arith.addi %0, %arg1 : i32
    %c0_i32 = arith.constant 0 : i32
    %c0_i32_0 = arith.constant 0 : i32
    return %1, %c0_i32 : i32, i32
  }
  func.func @transform_2(%arg0: i32, %arg1: i32) -> (i32, i32, i32) {
    %c0_i32 = arith.constant 0 : i32
    %c0_i32_0 = arith.constant 0 : i32
    %c0_i32_1 = arith.constant 0 : i32
    return %arg0, %c0_i32, %c0_i32_0 : i32, i32, i32
  }
  func.func @transform_3(%arg0: i32, %arg1: i32) -> (i32, i32, i32) {
    %c0_i32 = arith.constant 0 : i32
    %c0_i32_0 = arith.constant 0 : i32
    %c0_i32_1 = arith.constant 0 : i32
    return %arg0, %c0_i32, %c0_i32_0 : i32, i32, i32
  }
}

</mosaic_0001>

<llo_original>
// kernel: tpu_custom_call.1
$region0: #{tpu_custom_call.1}
  #allocation0 [shape = 'u32[]', space=smem, size = 0x4, offset = 0x4, fixed_abs, tag = 'smem constant byte address 0x4 - core index']
  #allocation1 [shape = 'u32[144,128]{1,0:T(1,128)}', space=vmem, size = 0x12000, scoped, tag = 'internal scratch']
  #allocation2 [shape = 'f32[8,128]{1,0:T(8,128)}', space=vmem, size = 0x1000, scoped, tag = 'scratch operand']
  #allocation3 [shape = 'f32[8,128]{1,0:T(8,128)}', space=vmem, size = 0x1000, scoped, tag = 'scratch operand']
  %s0 = inlined_call_operand.vmem [shape: f32[16,128], index: 0, kind: input, shape index: {}]
  %s1 = inlined_call_operand.vmem [shape: s32[16,128], index: 1, kind: input, shape index: {}]
  %s2 = inlined_call_operand.hbm [shape: f32[1,1,128], index: 2, kind: output, shape index: {0}]
  %s3 = inlined_call_operand.hbm [shape: f32[1,1,128], index: 3, kind: output, shape index: {1}]
  %4 = xla_tuple %s2, %s3
  %s5 = sld [smem:[#allocation0]]
  $region34: #{tpu_custom_call.1} parent=0
    _
  %s7 = ssub.s32 1, %s5
  %s8 = scalar_select 0, %s7, %s5
  $region1: #{tpu_custom_call.1} parent=0
    #allocation4 [shape = 'u8[512]{0}', space=vmem, size = 0x400, scoped, tag = 'output window, operand 0, single buffered']
    #allocation5 [shape = 's32[1]{0}', space=sflag, size = 0x4, scoped, tag = 'scoped memory for tpu_custom_call.1']
    #allocation6 [shape = 'u8[512]{0}', space=vmem, size = 0x400, scoped, tag = 'output window, operand 1, single buffered']
    #allocation7 [shape = 's32[1]{0}', space=sflag, size = 0x4, scoped, tag = 'scoped memory for tpu_custom_call.1']
    %9 = vsyncpa [#allocation5], 0
    %10 = vsyncpa [#allocation7], 0
    // Predicated region
    $region2: #{tpu_custom_call.1} parent=1 // pred_check
      _
    $region3: #{tpu_custom_call.1} parent=1 // pred_check_branch
      %12 = sbr.rel (0) target = $region5
    $region4: #{tpu_custom_call.1} parent=1 // pred_region
      %s13 = sadd.s32 0, 0
      %s14 = smul.u32 2, %s13
      %p15 = scmp.lt.s32.totalorder %s14, 1
      %s16 = scalar_select %p15, %s14, 1
      %s17 = smul.addr %s16, 8
      %s18 = scalar_lea.vmem %s0, %s17
      %s19 = sadd.s32 0, 0
      %s20 = smul.u32 2, %s19
    $region5: #{tpu_custom_call.1} parent=1 // pred_fallthru
      _
    // Predicated region
    $region6: #{tpu_custom_call.1} parent=1 // pred_check
      _
    $region7: #{tpu_custom_call.1} parent=1 // pred_check_branch
      %22 = sbr.rel (0) target = $region9
    $region8: #{tpu_custom_call.1} parent=1 // pred_region
      %s23 = sadd.s32 0, 0
      %s24 = smul.u32 2, %s23
      %p25 = scmp.lt.s32.totalorder %s24, 1
      %s26 = scalar_select %p25, %s24, 1
      %s27 = smul.addr %s26, 8
      %s28 = scalar_lea.vmem %s1, %s27
      %s29 = sadd.s32 0, 0
      %s30 = smul.u32 2, %s29
    $region9: #{tpu_custom_call.1} parent=1 // pred_fallthru
      _
    %s31 = sadd.s32 0, 0
    %s32 = smul.u32 2, %s31
    %p33 = scmp.lt.s32.totalorder %s32, 1
    %s34 = scalar_select %p33, %s32, 1
    %s35 = smul.addr %s34, 8
    %s36 = scalar_lea.vmem %s0, %s35
    %s37 = sadd.s32 0, 0
    %s38 = smul.u32 2, %s37
    %p39 = scmp.lt.s32.totalorder %s38, 1
    %s40 = scalar_select %p39, %s38, 1
    %s41 = smul.addr %s40, 8
    %s42 = scalar_lea.vmem %s1, %s41
    %s43 = sadd.s32 0, 0
    %s44 = smul.u32 2, %s43
    %p45 = scmp.lt.s32.totalorder %s44, 1
    %s46 = scalar_select %p45, %s44, 1
    %s47 = smul.addr %s46, 8
    %s48 = scalar_lea.vmem %s0, %s47
    %s49 = sadd.s32 0, 0
    %s50 = smul.u32 2, %s49
    %s51 = sadd.s32 0, 0
    %s52 = smul.u32 2, %s51
    %p53 = scmp.lt.s32.totalorder %s52, 1
    %s54 = scalar_select %p53, %s52, 1
    %s55 = smul.addr %s54, 8
    %s56 = scalar_lea.vmem %s1, %s55
    %s57 = sadd.s32 0, 0
    %s58 = smul.u32 2, %s57
    %p59 = scmp.eq.s32.totalorder 0, 0
    // Predicated region
    $region10: #{tpu_custom_call.1} parent=1 // pred_check
      %p60 = pneg %p59
    $region11: #{tpu_custom_call.1} parent=1 // pred_check_branch
      %62 = sbr.rel (%p60) target = $region13
    $region12: #{tpu_custom_call.1} parent=1 // pred_region
      %63 = vst [vmem:[#allocation2] sm:$0xff] 0.0
      %64 = vst [vmem:[#allocation3] sm:$0xff] 0.0
    $region13: #{tpu_custom_call.1} parent=1 // pred_fallthru
      _
    %v65 = vld [vmem:[%s48] sm:$0xff]
    %v66 = vld [vmem:[%s48 + $0x8] sm:$0xff]
    %v67 = vld [vmem:[%s56] sm:$0xff]
    %v68 = vld [vmem:[%s56 + $0x8] sm:$0xff]
    %vm69 = vcmp.ne.s32.totalorder %v67, 0
    %vm70 = vcmp.ne.s32.totalorder %v68, 0
    %v71 = vmin.f32 %v65, 0.024
    %v72 = vmin.f32 %v66, 0.024
    %v73 = vsub.f32 %v71, 0.024
    %v74 = vsub.f32 %v72, 0.024
    %v75 = vmax.f32 %v65, 3.024
    %v76 = vmax.f32 %v66, 3.024
    %v77 = vsub.f32 %v75, 3.024
    %v78 = vsub.f32 %v76, 3.024
    %v79 = vmul.f32 %v73, %v73
    %v80 = vmul.f32 %v74, %v74
    %v81 = vmul.f32 %v77, %v77
    %v82 = vmul.f32 %v78, %v78
    %v83 = vadd.f32 %v79, %v81
    %v84 = vadd.f32 %v80, %v82
    %v85 = vsel %vm69, %v83, 0.0
    %v86 = vsel %vm70, %v84, 0.0
    %v87 = vsel %vm69, 1, 0
    %v88 = vsel %vm70, 1, 0
    %v89 = vcvt.s32.f32 %v87
    %v90 = vcvt.s32.f32 %v88
    %v91 = vld [vmem:[#allocation2] sm:$0xff]
    %v92 = vadd.f32 %v85, %v86
    %v93 = vadd.f32 %v91, %v92
    %94 = vst [vmem:[#allocation2] sm:$0xff] %v93
    %v95 = vld [vmem:[#allocation3] sm:$0xff]
    %v96 = vadd.f32 %v89, %v90
    %v97 = vadd.f32 %v95, %v96
    %98 = vst [vmem:[#allocation3] sm:$0xff] %v97
    // Predicated region
    $region14: #{tpu_custom_call.1} parent=1 // pred_check
      %p99 = pneg %p59
    $region15: #{tpu_custom_call.1} parent=1 // pred_check_branch
      %101 = sbr.rel (%p99) target = $region17
    $region16: #{tpu_custom_call.1} parent=1 // pred_region
      %v102 = vld [vmem:[#allocation2] sm:$0xff]
      %v103 = vrot.slane %v102, 4
      %v104 = vadd.f32 %v102, %v103
      %v105 = vrot.slane %v104, 2
      %v106 = vadd.f32 %v104, %v105
      %v107 = vrot.slane %v106, 1
      %v108 = vadd.f32 %v106, %v107
      %109 = vst [vmem:[#allocation4] sm:$0x1] %v108
      %v110 = vld [vmem:[#allocation3] sm:$0xff]
      %v111 = vrot.slane %v110, 4
      %v112 = vadd.f32 %v110, %v111
      %v113 = vrot.slane %v112, 2
      %v114 = vadd.f32 %v112, %v113
      %v115 = vrot.slane %v114, 1
      %v116 = vadd.f32 %v114, %v115
      %117 = vst [vmem:[#allocation6] sm:$0x1] %v116
    $region17: #{tpu_custom_call.1} parent=1 // pred_fallthru
      _
    // Predicated region
    $region18: #{tpu_custom_call.1} parent=1 // pred_check
      _
    $region19: #{tpu_custom_call.1} parent=1 // pred_check_branch
      %119 = sbr.rel (0) target = $region21
    $region20: #{tpu_custom_call.1} parent=1 // pred_region
      %s121 = ssub.s32 16, 16
      %122 = vsyncadd [#allocation5], %s121
      %s124 = sshll.u32 [#allocation4], 4
      %s125 = int_to_ptr.vmem [resolvable:$true] %s124
      %127 = dma.vmem_to_hbm [thread:$0]  %s125, 16, %s2, [#allocation5]
    $region21: #{tpu_custom_call.1} parent=1 // pred_fallthru
      _
    // Predicated region
    $region22: #{tpu_custom_call.1} parent=1 // pred_check
      _
    $region23: #{tpu_custom_call.1} parent=1 // pred_check_branch
      %129 = sbr.rel (0) target = $region25
    $region24: #{tpu_custom_call.1} parent=1 // pred_region
      %s131 = ssub.s32 16, 16
      %132 = vsyncadd [#allocation7], %s131
      %s134 = sshll.u32 [#allocation6], 4
      %s135 = int_to_ptr.vmem [resolvable:$true] %s134
      %137 = dma.vmem_to_hbm [thread:$0]  %s135, 16, %s3, [#allocation7]
    $region25: #{tpu_custom_call.1} parent=1 // pred_fallthru
      _
    // Predicated region
    $region26: #{tpu_custom_call.1} parent=1 // pred_check
      _
    $region27: #{tpu_custom_call.1} parent=1 // pred_check_branch
      %139 = sbr.rel (0) target = $region29
    $region28: #{tpu_custom_call.1} parent=1 // pred_region
      %140 = dma.done [#allocation5], 16
    $region29: #{tpu_custom_call.1} parent=1 // pred_fallthru
      _
    // Predicated region
    $region30: #{tpu_custom_call.1} parent=1 // pred_check
      _
    $region31: #{tpu_custom_call.1} parent=1 // pred_check_branch
      %142 = sbr.rel (0) target = $region33
    $region32: #{tpu_custom_call.1} parent=1 // pred_region
      %143 = dma.done [#allocation7], 16
    $region33: #{tpu_custom_call.1} parent=1 // pred_fallthru
      _
    %144 = vsyncpa [#allocation5], 1
    %145 = vsyncpa [#allocation7], 1

</llo_original>
